<compile_context>
chip_gen: v5e
topology: v5e:2x2
jax: 0.10.0
libtpu: 0.0.40
codegen_flags: <defaults>
</compile_context>

<pallas_src>
import functools

import jax
import jax.numpy as jnp
import numpy as np
from jax.experimental import pallas as pl
from jax.experimental.pallas import tpu as pltpu


def _round_up(x, m):
    return ((x + m - 1) // m) * m


def _rebinarize(x01, thr):
    """(x01 >= thr) for a {0,1}-valued float map, specialised on static thr."""
    if thr <= 0.0:
        return jnp.ones_like(x01)
    elif thr <= 1.0:
        return x01          # x >= thr  <=>  x == 1  when 0 < thr <= 1
    return jnp.zeros_like(x01)


def _count(t_b, p_b, valid):
    """hits / misses / false-alarms per row, masking padded lanes."""
    t_bv = t_b if valid is None else t_b * valid
    p_bv = p_b if valid is None else p_b * valid
    hits = jnp.sum(t_bv * p_b, axis=1, keepdims=True)      # (TB, 1)
    sum_t = jnp.sum(t_bv, axis=1, keepdims=True)
    sum_p = jnp.sum(p_bv, axis=1, keepdims=True)
    return hits, sum_t - hits, sum_p - hits


def _mcsi_counts_kernel(yp_ref, yt_ref, cnt_ref, *, thresholds, n_pix, wp):
    """One block of TB images: all thresholds fused, counts-only output."""
    yp = yp_ref[...].astype(jnp.float32)                    # (TB, Wp)
    yt = yt_ref[...].astype(jnp.float32)
    tb = yp.shape[0]

    if n_pix < wp:
        lane = jax.lax.broadcasted_iota(jnp.int32, yp.shape, 1)
        valid = (lane < n_pix).astype(jnp.float32)
    else:
        valid = None

    per_thresh = []

    # --- first threshold: raw data, NaN-masked ---
    thr0 = jnp.float32(thresholds[0])
    nan = jnp.isnan(yt) | jnp.isnan(yp)
    t_b = jnp.where(nan, 0.0, (yt >= thr0).astype(jnp.float32))
    p_b = jnp.where(nan, 0.0, (yp >= thr0).astype(jnp.float32))
    per_thresh.append(_count(t_b, p_b, valid))

    # --- remaining thresholds: inputs are already {0,1}, never NaN ---
    for thr in thresholds[1:]:
        t_b = _rebinarize(t_b, float(thr))
        p_b = _rebinarize(p_b, float(thr))
        per_thresh.append(_count(t_b, p_b, valid))

    # Assemble one lane-dense (TB, 128) slab and store it in a single write.
    out = jnp.zeros((tb, cnt_ref.shape[1]), jnp.float32)
    lane_o = jax.lax.broadcasted_iota(jnp.int32, out.shape, 1)
    for i, (h, m, f) in enumerate(per_thresh):
        out = jnp.where(lane_o == 3 * i + 0, h, out)
        out = jnp.where(lane_o == 3 * i + 1, m, out)
        out = jnp.where(lane_o == 3 * i + 2, f, out)
    cnt_ref[...] = out


def mcsi_forward(y_pred, y_true,
                 thresholds=(-42.98, -39.28, -36.34), eps=1e-4):
    """Pallas-backed mCSI forward; mirrors the PyTorch module exactly."""
    assert y_pred.shape == y_true.shape and y_pred.ndim == 4
    B, T, H, W = y_pred.shape
    BT, n_pix = B * T, H * W
    # f32 count sums are exact only while per-image counts stay < 2**24.
    assert n_pix < (1 << 24), "H*W too large for exact f32 counts"
    n_thr = len(thresholds)
    assert 1 <= 3 * n_thr <= 128

    wp = max(128, _round_up(n_pix, 128))                    # lane-dense pixels
    in_bytes = jnp.dtype(y_pred.dtype).itemsize

    # Row tile: ~1 MiB input blocks (well under VMEM on v5e/v6e/v7x), a
    # multiple of 8, and keep at least ~4 parallel grid steps on big inputs
    # so both v7x TensorCores get work.
    tb = max(8, min(1024, (1 << 20) // max(1, wp * in_bytes)))
    tb = max(8, (tb // 8) * 8)
    tb = min(tb, max(8, _round_up(-(-BT // 4), 8)))
    bt_pad = _round_up(BT, tb)
    grid = bt_pad // tb

    yp = y_pred.reshape(BT, n_pix)
    yt = y_true.reshape(BT, n_pix)
    if bt_pad != BT or wp != n_pix:
        pad = ((0, bt_pad - BT), (0, wp - n_pix))
        yp = jnp.pad(yp, pad)
        yt = jnp.pad(yt, pad)

    kernel = functools.partial(
        _mcsi_counts_kernel,
        thresholds=tuple(float(t) for t in thresholds),
        n_pix=n_pix, wp=wp)

    in_spec = pl.BlockSpec((tb, wp), lambda i: (i, 0))
    out_spec = pl.BlockSpec((tb, 128), lambda i: (i, 0))

    counts = pl.pallas_call(
        kernel,
        out_shape=jax.ShapeDtypeStruct((bt_pad, 128), jnp.float32),
        grid=(grid,),
        in_specs=[in_spec, in_spec],
        out_specs=out_spec,
        compiler_params=pltpu.CompilerParams(
            dimension_semantics=("parallel",),
            vmem_limit_bytes=48 * 1024 * 1024),
    )(yp, yt)

    counts = counts[:BT, :3 * n_thr]

    results = jnp.float32(0.0)
    for i in range(n_thr):
        hits = counts[:, 3 * i + 0].astype(jnp.int32)
        misses = counts[:, 3 * i + 1].astype(jnp.int32)
        fas = counts[:, 3 * i + 2].astype(jnp.int32)
        csi = hits / (hits + misses + fas + eps)
        results = results + csi.mean()
    return results / n_thr


def mcsi_reference(y_pred, y_true,
                   thresholds=(-42.98, -39.28, -36.34), eps=1e-4):
    """Pure-JAX reference with identical semantics (for verification)."""
    results = jnp.float32(0.0)
    for thresh in thresholds:
        yt_b = (y_true >= thresh).astype(jnp.float32)
        yp_b = (y_pred >= thresh).astype(jnp.float32)
        nan = jnp.isnan(y_true) | jnp.isnan(y_pred)
        yt_b = jnp.where(nan, 0.0, yt_b)
        yp_b = jnp.where(nan, 0.0, yp_b)
        y_true, y_pred = yt_b, yp_b
        hits = jnp.sum(yt_b * yp_b, axis=(-2, -1)).astype(jnp.int32)
        misses = jnp.sum(yt_b * (1.0 - yp_b), axis=(-2, -1)).astype(jnp.int32)
        fas = jnp.sum((1.0 - yt_b) * yp_b, axis=(-2, -1)).astype(jnp.int32)
        csi = hits / (hits + misses + fas + eps)
        results = results + csi.mean()
    return results / len(thresholds)


if __name__ == "__main__":
    key = jax.random.PRNGKey(0)

    # --- test 1: default shapes / thresholds, NaN handling ---
    B, T, H, W = 2, 8, 16, 16
    kp, kt = jax.random.split(key)
    y_pred = jax.random.normal(kp, (B, T, H, W), jnp.float32) * 5.0 - 40.0
    y_true = jax.random.normal(kt, (B, T, H, W), jnp.float32) * 5.0 - 40.0
    y_pred = y_pred.at[0, 0, 0, :3].set(jnp.nan)
    y_true = y_true.at[1, 3, 5, 7].set(jnp.nan)

    out = jax.block_until_ready(mcsi_forward(y_pred, y_true))
    ref = jax.block_until_ready(mcsi_reference(y_pred, y_true))
    np.testing.assert_allclose(np.asarray(out), np.asarray(ref),
                               rtol=1e-5, atol=1e-6)

    # --- test 2: non-128-multiple pixel count (exercises lane-mask path) ---
    B2, T2, H2, W2 = 2, 4, 12, 20
    kp2, kt2 = jax.random.split(jax.random.PRNGKey(1))
    y_pred2 = jax.random.normal(kp2, (B2, T2, H2, W2), jnp.float32) * 5.0 - 40.0
    y_true2 = jax.random.normal(kt2, (B2, T2, H2, W2), jnp.float32) * 5.0 - 40.0
    y_true2 = y_true2.at[0, 1, 2, 3].set(jnp.nan)
    out2 = jax.block_until_ready(mcsi_forward(y_pred2, y_true2))
    ref2 = jax.block_until_ready(mcsi_reference(y_pred2, y_true2))
    np.testing.assert_allclose(np.asarray(out2), np.asarray(ref2),
                               rtol=1e-5, atol=1e-6)

    # --- test 3: non-default thresholds (exercises all rebinarize branches) ---
    thr = (-40.0, 0.5, 2.0)
    out3 = jax.block_until_ready(mcsi_forward(y_pred, y_true, thresholds=thr))
    ref3 = jax.block_until_ready(mcsi_reference(y_pred, y_true, thresholds=thr))
    np.testing.assert_allclose(np.asarray(out3), np.asarray(ref3),
                               rtol=1e-5, atol=1e-6)

    print("KERNEL_OK")
</pallas_src>

<mosaic_0001>
module attributes {stable_mosaic.version = 11 : i64} {
  func.func @_mcsi_counts_kernel(%arg0: i32, %arg1: memref<8x256xf32, #tpu.memory_space<vmem>>, %arg2: memref<8x256xf32, #tpu.memory_space<vmem>>, %arg3: memref<8x128xf32, #tpu.memory_space<vmem>>) attributes {dimension_semantics = [#tpu.dimension_semantics<parallel>], iteration_bounds = array<i64: 2>, scalar_prefetch = 0 : i64, scratch_operands = 0 : i64, tpu.core_type = #tpu.core_type<tc>, window_params = [{transform_indices = @transform_0, window_bounds = array<i64: 8, 256>}, {transform_indices = @transform_1, window_bounds = array<i64: 8, 256>}, {transform_indices = @transform_2, window_bounds = array<i64: 8, 128>}]} {
    %c0 = arith.constant 0 : index
    %c0_0 = arith.constant 0 : index
    %0 = vector.load %arg1[%c0, %c0_0] : memref<8x256xf32, #tpu.memory_space<vmem>>, vector<8x256xf32>
    %c0_1 = arith.constant 0 : index
    %c0_2 = arith.constant 0 : index
    %1 = vector.load %arg2[%c0_1, %c0_2] : memref<8x256xf32, #tpu.memory_space<vmem>>, vector<8x256xf32>
    %2 = arith.cmpf one, %1, %1 : vector<8x256xf32>
    %3 = arith.cmpf one, %0, %0 : vector<8x256xf32>
    %4 = arith.ori %2, %3 : vector<8x256xi1>
    %cst = arith.constant -4.298000e+01 : f32
    %5 = vector.broadcast %cst : f32 to vector<8x256xf32>
    %6 = arith.cmpf oge, %1, %5 : vector<8x256xf32>
    %7 = arith.extui %6 : vector<8x256xi1> to vector<8x256xi32>
    %8 = arith.sitofp %7 : vector<8x256xi32> to vector<8x256xf32>
    %cst_3 = arith.constant 0.000000e+00 : f32
    %9 = vector.broadcast %cst_3 : f32 to vector<8x256xf32>
    %10 = arith.select %4, %9, %8 : vector<8x256xi1>, vector<8x256xf32>
    %cst_4 = arith.constant -4.298000e+01 : f32
    %11 = vector.broadcast %cst_4 : f32 to vector<8x256xf32>
    %12 = arith.cmpf oge, %0, %11 : vector<8x256xf32>
    %13 = arith.extui %12 : vector<8x256xi1> to vector<8x256xi32>
    %14 = arith.sitofp %13 : vector<8x256xi32> to vector<8x256xf32>
    %cst_5 = arith.constant 0.000000e+00 : f32
    %15 = vector.broadcast %cst_5 : f32 to vector<8x256xf32>
    %16 = arith.select %4, %15, %14 : vector<8x256xi1>, vector<8x256xf32>
    %17 = arith.mulf %10, %16 : vector<8x256xf32>
    %cst_6 = arith.constant dense<0.000000e+00> : vector<8xf32>
    %18 = vector.multi_reduction <add>, %17, %cst_6 [1] : vector<8x256xf32> to vector<8xf32>
    %19 = vector.shape_cast %18 : vector<8xf32> to vector<8x1xf32>
    %cst_7 = arith.constant dense<0.000000e+00> : vector<8xf32>
    %20 = vector.multi_reduction <add>, %10, %cst_7 [1] : vector<8x256xf32> to vector<8xf32>
    %21 = vector.shape_cast %20 : vector<8xf32> to vector<8x1xf32>
    %cst_8 = arith.constant dense<0.000000e+00> : vector<8xf32>
    %22 = vector.multi_reduction <add>, %16, %cst_8 [1] : vector<8x256xf32> to vector<8xf32>
    %23 = vector.shape_cast %22 : vector<8xf32> to vector<8x1xf32>
    %24 = arith.subf %21, %19 : vector<8x1xf32>
    %25 = arith.subf %23, %19 : vector<8x1xf32>
    %cst_9 = arith.constant 1.000000e+00 : f32
    %26 = vector.broadcast %cst_9 : f32 to vector<8x256xf32>
    %cst_10 = arith.constant 1.000000e+00 : f32
    %27 = vector.broadcast %cst_10 : f32 to vector<8x256xf32>
    %28 = arith.mulf %26, %27 : vector<8x256xf32>
    %cst_11 = arith.constant dense<0.000000e+00> : vector<8xf32>
    %29 = vector.multi_reduction <add>, %28, %cst_11 [1] : vector<8x256xf32> to vector<8xf32>
    %30 = vector.shape_cast %29 : vector<8xf32> to vector<8x1xf32>
    %cst_12 = arith.constant dense<0.000000e+00> : vector<8xf32>
    %31 = vector.multi_reduction <add>, %26, %cst_12 [1] : vector<8x256xf32> to vector<8xf32>
    %32 = vector.shape_cast %31 : vector<8xf32> to vector<8x1xf32>
    %cst_13 = arith.constant dense<0.000000e+00> : vector<8xf32>
    %33 = vector.multi_reduction <add>, %27, %cst_13 [1] : vector<8x256xf32> to vector<8xf32>
    %34 = vector.shape_cast %33 : vector<8xf32> to vector<8x1xf32>
    %35 = arith.subf %32, %30 : vector<8x1xf32>
    %36 = arith.subf %34, %30 : vector<8x1xf32>
    %cst_14 = arith.constant 1.000000e+00 : f32
    %37 = vector.broadcast %cst_14 : f32 to vector<8x256xf32>
    %cst_15 = arith.constant 1.000000e+00 : f32
    %38 = vector.broadcast %cst_15 : f32 to vector<8x256xf32>
    %39 = arith.mulf %37, %38 : vector<8x256xf32>
    %cst_16 = arith.constant dense<0.000000e+00> : vector<8xf32>
    %40 = vector.multi_reduction <add>, %39, %cst_16 [1] : vector<8x256xf32> to vector<8xf32>
    %41 = vector.shape_cast %40 : vector<8xf32> to vector<8x1xf32>
    %cst_17 = arith.constant dense<0.000000e+00> : vector<8xf32>
    %42 = vector.multi_reduction <add>, %37, %cst_17 [1] : vector<8x256xf32> to vector<8xf32>
    %43 = vector.shape_cast %42 : vector<8xf32> to vector<8x1xf32>
    %cst_18 = arith.constant dense<0.000000e+00> : vector<8xf32>
    %44 = vector.multi_reduction <add>, %38, %cst_18 [1] : vector<8x256xf32> to vector<8xf32>
    %45 = vector.shape_cast %44 : vector<8xf32> to vector<8x1xf32>
    %46 = arith.subf %43, %41 : vector<8x1xf32>
    %47 = arith.subf %45, %41 : vector<8x1xf32>
    %cst_19 = arith.constant 0.000000e+00 : f32
    %48 = vector.broadcast %cst_19 : f32 to vector<8x128xf32>
    %49 = tpu.iota {dimensions = array<i32: 1>} : vector<8x128xi32>
    %c0_i32 = arith.constant 0 : i32
    %50 = vector.broadcast %c0_i32 : i32 to vector<8x128xi32>
    %51 = arith.cmpi eq, %49, %50 : vector<8x128xi32>
    %52 = vector.shape_cast %19 : vector<8x1xf32> to vector<8x1xf32>
    %53 = vector.broadcast %52 : vector<8x1xf32> to vector<8x128xf32>
    %54 = arith.select %51, %53, %48 : vector<8x128xi1>, vector<8x128xf32>
    %c1_i32 = arith.constant 1 : i32
    %55 = vector.broadcast %c1_i32 : i32 to vector<8x128xi32>
    %56 = arith.cmpi eq, %49, %55 : vector<8x128xi32>
    %57 = vector.shape_cast %24 : vector<8x1xf32> to vector<8x1xf32>
    %58 = vector.broadcast %57 : vector<8x1xf32> to vector<8x128xf32>
    %59 = arith.select %56, %58, %54 : vector<8x128xi1>, vector<8x128xf32>
    %c2_i32 = arith.constant 2 : i32
    %60 = vector.broadcast %c2_i32 : i32 to vector<8x128xi32>
    %61 = arith.cmpi eq, %49, %60 : vector<8x128xi32>
    %62 = vector.shape_cast %25 : vector<8x1xf32> to vector<8x1xf32>
    %63 = vector.broadcast %62 : vector<8x1xf32> to vector<8x128xf32>
    %64 = arith.select %61, %63, %59 : vector<8x128xi1>, vector<8x128xf32>
    %c3_i32 = arith.constant 3 : i32
    %65 = vector.broadcast %c3_i32 : i32 to vector<8x128xi32>
    %66 = arith.cmpi eq, %49, %65 : vector<8x128xi32>
    %67 = vector.shape_cast %30 : vector<8x1xf32> to vector<8x1xf32>
    %68 = vector.broadcast %67 : vector<8x1xf32> to vector<8x128xf32>
    %69 = arith.select %66, %68, %64 : vector<8x128xi1>, vector<8x128xf32>
    %c4_i32 = arith.constant 4 : i32
    %70 = vector.broadcast %c4_i32 : i32 to vector<8x128xi32>
    %71 = arith.cmpi eq, %49, %70 : vector<8x128xi32>
    %72 = vector.shape_cast %35 : vector<8x1xf32> to vector<8x1xf32>
    %73 = vector.broadcast %72 : vector<8x1xf32> to vector<8x128xf32>
    %74 = arith.select %71, %73, %69 : vector<8x128xi1>, vector<8x128xf32>
    %c5_i32 = arith.constant 5 : i32
    %75 = vector.broadcast %c5_i32 : i32 to vector<8x128xi32>
    %76 = arith.cmpi eq, %49, %75 : vector<8x128xi32>
    %77 = vector.shape_cast %36 : vector<8x1xf32> to vector<8x1xf32>
    %78 = vector.broadcast %77 : vector<8x1xf32> to vector<8x128xf32>
    %79 = arith.select %76, %78, %74 : vector<8x128xi1>, vector<8x128xf32>
    %c6_i32 = arith.constant 6 : i32
    %80 = vector.broadcast %c6_i32 : i32 to vector<8x128xi32>
    %81 = arith.cmpi eq, %49, %80 : vector<8x128xi32>
    %82 = vector.shape_cast %41 : vector<8x1xf32> to vector<8x1xf32>
    %83 = vector.broadcast %82 : vector<8x1xf32> to vector<8x128xf32>
    %84 = arith.select %81, %83, %79 : vector<8x128xi1>, vector<8x128xf32>
    %c7_i32 = arith.constant 7 : i32
    %85 = vector.broadcast %c7_i32 : i32 to vector<8x128xi32>
    %86 = arith.cmpi eq, %49, %85 : vector<8x128xi32>
    %87 = vector.shape_cast %46 : vector<8x1xf32> to vector<8x1xf32>
    %88 = vector.broadcast %87 : vector<8x1xf32> to vector<8x128xf32>
    %89 = arith.select %86, %88, %84 : vector<8x128xi1>, vector<8x128xf32>
    %c8_i32 = arith.constant 8 : i32
    %90 = vector.broadcast %c8_i32 : i32 to vector<8x128xi32>
    %91 = arith.cmpi eq, %49, %90 : vector<8x128xi32>
    %92 = vector.shape_cast %47 : vector<8x1xf32> to vector<8x1xf32>
    %93 = vector.broadcast %92 : vector<8x1xf32> to vector<8x128xf32>
    %94 = arith.select %91, %93, %89 : vector<8x128xi1>, vector<8x128xf32>
    %c0_20 = arith.constant 0 : index
    %c0_21 = arith.constant 0 : index
    %95 = vector.load %arg3[%c0_20, %c0_21] : memref<8x128xf32, #tpu.memory_space<vmem>>, vector<8x128xf32>
    tpu.vector_store %arg3[%c0_20, %c0_21], %94 {strides = array<i32>} : memref<8x128xf32, #tpu.memory_space<vmem>>, vector<8x128xf32>,
    return
  }
  func.func @transform_0(%arg0: i32) -> (i32, i32) {
    %c0_i32 = arith.constant 0 : i32
    %c0_i32_0 = arith.constant 0 : i32
    return %arg0, %c0_i32 : i32, i32
  }
  func.func @transform_1(%arg0: i32) -> (i32, i32) {
    %c0_i32 = arith.constant 0 : i32
    %c0_i32_0 = arith.constant 0 : i32
    return %arg0, %c0_i32 : i32, i32
  }
  func.func @transform_2(%arg0: i32) -> (i32, i32) {
    %c0_i32 = arith.constant 0 : i32
    %c0_i32_0 = arith.constant 0 : i32
    return %arg0, %c0_i32 : i32, i32
  }
}

</mosaic_0001>

<llo_original>
// kernel: tpu_custom_call.1
$region0: #{tpu_custom_call.1}
  #allocation0 [shape = 'u32[]', space=smem, size = 0x4, offset = 0x4, fixed_abs, tag = 'smem constant byte address 0x4 - core index']
  #allocation1 [shape = 'u32[72,128]{1,0:T(1,128)}', space=vmem, size = 0x9000, scoped, tag = 'internal scratch']
  %s0 = inlined_call_operand.hbm [shape: f32[16,256], index: 0, kind: input, shape index: {}]
  %s1 = inlined_call_operand.hbm [shape: f32[16,256], index: 1, kind: input, shape index: {}]
  %s2 = inlined_call_operand.hbm [shape: f32[16,128], index: 2, kind: output, shape index: {}]
  %s3 = sld [smem:[#allocation0]]
  $region49: #{tpu_custom_call.1} parent=0
    _
  %s5 = ssub.s32 1, %s3
  %s6 = scalar_select 0, %s5, %s3
  $region1: #{tpu_custom_call.1} parent=0
    #allocation2 [shape = 'u8[16384]{0}', space=vmem, size = 0x4000, scoped, tag = 'input window, operand 0']
    #allocation3 [shape = 's32[2]{0}', space=sflag, size = 0x8, scoped, tag = 'scoped memory for tpu_custom_call.1']
    #allocation4 [shape = 's32[2]{0}', space=sflag, size = 0x8, scoped, tag = 'scoped memory for tpu_custom_call.1']
    #allocation5 [shape = 'u8[16384]{0}', space=vmem, size = 0x4000, scoped, tag = 'input window, operand 1']
    #allocation6 [shape = 's32[2]{0}', space=sflag, size = 0x8, scoped, tag = 'scoped memory for tpu_custom_call.1']
    #allocation7 [shape = 'u8[8192]{0}', space=vmem, size = 0x2000, scoped, tag = 'output window, operand 0']
    %7 = vsyncpa [#allocation3], 0
    %s8 = scalar_lea.sflag [#allocation3], 1
    %9 = vsyncpa %s8, 0
    %10 = vsyncpa [#allocation6], 0
    %s11 = scalar_lea.sflag [#allocation6], 1
    %12 = vsyncpa %s11, 0
    %13 = vsyncpa [#allocation4], 0
    %s14 = scalar_lea.sflag [#allocation4], 1
    %15 = vsyncpa %s14, 0
    loop: start=0, step=1, limit=4
    $region2: #{tpu_custom_call.1} parent=1 // loop_pre_header
      _
    $region3: #{tpu_custom_call.1} parent=1 // loop_header
      %s17 = sphi 0, %s21
      %p18 = scmp.ge.s32.totalorder %s17, 4
      %s27 = sphi 0, %s29
      %s30 = sphi 0, %s27
      %s31 = sphi 0, %s30
      %s47 = sphi 0, %s31
      %s53 = sphi 0, %s55
      %s56 = sphi 0, %s53
      %s57 = sphi 0, %s56
      %s73 = sphi 0, %s57
      %s79 = sphi 0, %s81
      %s82 = sphi 0, %s79
      %s83 = sphi 0, %s82
      %s99 = sphi 0, %s83
    $region4: #{tpu_custom_call.1} parent=1 // loop_header_branch
      %20 = sbr.rel (%p18) target = $region8
    $region5: #{tpu_custom_call.1} parent=1 // loop_body
      %s22 = ssub.s32 %s17, 1
      %s23 = ssub.s32 %s17, 2
      %s24 = sadd.s32 %s17, 1
      %s25 = ssub.s32 %s17, %s24
      %p26 = scmp.eq.s32.totalorder %s25, 0
      %s28 = sadd.s32 %s27, 1
      %s29 = scalar_select %p26, %s27, %s28
      %p32 = pneg %p26
      %p33 = scmp.eq.s32.totalorder %s17, 1
      %p34 = por %p32, %p33
      %p35 = scmp.ne.s32.totalorder %s27, %s30
      %p36 = scmp.eq.s32.totalorder %s17, 0
      %p37 = por %p35, %p36
      %p38 = scmp.ne.s32.totalorder %s27, %s30
      %p39 = scmp.eq.s32.totalorder %s22, 1
      %p40 = por %p38, %p39
      %p41 = scmp.ne.s32.totalorder %s30, %s31
      %p42 = scmp.eq.s32.totalorder %s22, 0
      %p43 = por %p41, %p42
      %p44 = scmp.ne.s32.totalorder %s30, %s31
      %p45 = scmp.eq.s32.totalorder %s23, 1
      %p46 = por %p44, %p45
      %p48 = scmp.ne.s32.totalorder %s31, %s47
      %p49 = scmp.eq.s32.totalorder %s23, 0
      %p50 = por %p48, %p49
      %s51 = ssub.s32 %s17, %s24
      %p52 = scmp.eq.s32.totalorder %s51, 0
      %s54 = sadd.s32 %s53, 1
      %s55 = scalar_select %p52, %s53, %s54
      %p58 = pneg %p52
      %p59 = scmp.eq.s32.totalorder %s17, 1
      %p60 = por %p58, %p59
      %p61 = scmp.ne.s32.totalorder %s53, %s56
      %p62 = scmp.eq.s32.totalorder %s17, 0
      %p63 = por %p61, %p62
      %p64 = scmp.ne.s32.totalorder %s53, %s56
      %p65 = scmp.eq.s32.totalorder %s22, 1
      %p66 = por %p64, %p65
      %p67 = scmp.ne.s32.totalorder %s56, %s57
      %p68 = scmp.eq.s32.totalorder %s22, 0
      %p69 = por %p67, %p68
      %p70 = scmp.ne.s32.totalorder %s56, %s57
      %p71 = scmp.eq.s32.totalorder %s23, 1
      %p72 = por %p70, %p71
      %p74 = scmp.ne.s32.totalorder %s57, %s73
      %p75 = scmp.eq.s32.totalorder %s23, 0
      %p76 = por %p74, %p75
      %s77 = ssub.s32 %s17, %s24
      %p78 = scmp.eq.s32.totalorder %s77, 0
      %s80 = sadd.s32 %s79, 1
      %s81 = scalar_select %p78, %s79, %s80
      %p84 = pneg %p78
      %p85 = scmp.eq.s32.totalorder %s17, 1
      %p86 = por %p84, %p85
      %p87 = scmp.ne.s32.totalorder %s79, %s82
      %p88 = scmp.eq.s32.totalorder %s17, 0
      %p89 = por %p87, %p88
      %p90 = scmp.ne.s32.totalorder %s79, %s82
      %p91 = scmp.eq.s32.totalorder %s22, 1
      %p92 = por %p90, %p91
      %p93 = scmp.ne.s32.totalorder %s82, %s83
      %p94 = scmp.eq.s32.totalorder %s22, 0
      %p95 = por %p93, %p94
      %p96 = scmp.ne.s32.totalorder %s82, %s83
      %p97 = scmp.eq.s32.totalorder %s23, 1
      %p98 = por %p96, %p97
      %p100 = scmp.ne.s32.totalorder %s83, %s99
      %p101 = scmp.eq.s32.totalorder %s23, 0
      %p102 = por %p100, %p101
      %p103 = scmp.le.s32.totalorder 1, %s17
      %p104 = scmp.lt.s32.totalorder %s17, 3
      %p105 = pnand %p103, %p104
      %p106 = pneg %p105
      // Predicated region
      $region9: #{tpu_custom_call.1} parent=5 // pred_check
        _
      $region10: #{tpu_custom_call.1} parent=5 // pred_check_branch
        %108 = sbr.rel (%p105) target = $region12
      $region11: #{tpu_custom_call.1} parent=5 // pred_region
        %s109 = ssub.s32 %s17, 1
      $region12: #{tpu_custom_call.1} parent=5 // pred_fallthru
        _
      %p110 = scmp.lt.s32.totalorder %s17, 2
      // Predicated region
      $region13: #{tpu_custom_call.1} parent=5 // pred_check
        %p111 = pneg %p110
      $region14: #{tpu_custom_call.1} parent=5 // pred_check_branch
        %113 = sbr.rel (%p111) target = $region16
      $region15: #{tpu_custom_call.1} parent=5 // pred_region
        // Predicated region
        $region17: #{tpu_custom_call.1} parent=15 // pred_check
          %p114 = pneg %p37
        $region18: #{tpu_custom_call.1} parent=15 // pred_check_branch
          %116 = sbr.rel (%p114) target = $region20
        $region19: #{tpu_custom_call.1} parent=15 // pred_region
          %s117 = sand.u32 %s27, 1
          %s118 = scalar_lea.sflag [#allocation3], %s117
          %s119 = sand.u32 %s27, 1
          %s120 = smul.addr %s119, 16
          %s121 = scalar_lea.vmem [#allocation2], %s120
          %123 = vsyncadd %s118, 0
          %s124 = smul.addr %s17, 2
          %s125 = smul.addr %s124, 8
          %s126 = scalar_lea.hbm %s0, %s125
          %s128 = sshll.u32 %s126, 4
          %s129 = int_to_ptr.hbm [resolvable:$true] %s128
          %s130 = sshll.u32 %s121, 4
          %s131 = int_to_ptr.vmem [resolvable:$true] %s130
          %133 = dma.hbm_to_vmem [thread:$0]  %s129, 256, %s131, %s118
        $region20: #{tpu_custom_call.1} parent=15 // pred_fallthru
          _
        // Predicated region
        $region21: #{tpu_custom_call.1} parent=15 // pred_check
          %p134 = pneg %p63
        $region22: #{tpu_custom_call.1} parent=15 // pred_check_branch
          %136 = sbr.rel (%p134) target = $region24
        $region23: #{tpu_custom_call.1} parent=15 // pred_region
          %s137 = sand.u32 %s53, 1
          %s138 = scalar_lea.sflag [#allocation6], %s137
          %s139 = sand.u32 %s53, 1
          %s140 = smul.addr %s139, 16
          %s141 = scalar_lea.vmem [#allocation5], %s140
          %143 = vsyncadd %s138, 0
          %s144 = smul.addr %s17, 2
          %s145 = smul.addr %s144, 8
          %s146 = scalar_lea.hbm %s1, %s145
          %s148 = sshll.u32 %s146, 4
          %s149 = int_to_ptr.hbm [resolvable:$true] %s148
          %s150 = sshll.u32 %s141, 4
          %s151 = int_to_ptr.vmem [resolvable:$true] %s150
          %153 = dma.hbm_to_vmem [thread:$0]  %s149, 256, %s151, %s138
        $region24: #{tpu_custom_call.1} parent=15 // pred_fallthru
          _
      $region16: #{tpu_custom_call.1} parent=5 // pred_fallthru
        _
      %p154 = scmp.le.s32.totalorder 1, %s17
      %p155 = scmp.lt.s32.totalorder %s17, 3
      %p156 = pnand %p154, %p155
      %p157 = pneg %p156
      // Predicated region
      $region25: #{tpu_custom_call.1} parent=5 // pred_check
        _
      $region26: #{tpu_custom_call.1} parent=5 // pred_check_branch
        %159 = sbr.rel (%p156) target = $region28
      $region27: #{tpu_custom_call.1} parent=5 // pred_region
        %s160 = ssub.s32 %s17, 1
        %s161 = sand.u32 %s30, 1
        %s162 = scalar_lea.sflag [#allocation3], %s161
        %s163 = sand.u32 %s30, 1
        %s164 = smul.addr %s163, 16
        %s165 = scalar_lea.vmem [#allocation2], %s164
        // Predicated region
        $region29: #{tpu_custom_call.1} parent=27 // pred_check
          %p166 = pneg %p43
        $region30: #{tpu_custom_call.1} parent=27 // pred_check_branch
          %168 = sbr.rel (%p166) target = $region32
        $region31: #{tpu_custom_call.1} parent=27 // pred_region
          %170 = dma.done %s162, 256
        $region32: #{tpu_custom_call.1} parent=27 // pred_fallthru
          _
        %s171 = sand.u32 %s56, 1
        %s172 = scalar_lea.sflag [#allocation6], %s171
        %s173 = sand.u32 %s56, 1
        %s174 = smul.addr %s173, 16
        %s175 = scalar_lea.vmem [#allocation5], %s174
        // Predicated region
        $region33: #{tpu_custom_call.1} parent=27 // pred_check
          %p176 = pneg %p69
        $region34: #{tpu_custom_call.1} parent=27 // pred_check_branch
          %178 = sbr.rel (%p176) target = $region36
        $region35: #{tpu_custom_call.1} parent=27 // pred_region
          %180 = dma.done %s172, 256
        $region36: #{tpu_custom_call.1} parent=27 // pred_fallthru
          _
        %s181 = sand.u32 %s30, 1
        %s182 = scalar_lea.sflag [#allocation3], %s181
        %s183 = sand.u32 %s30, 1
        %s184 = smul.addr %s183, 16
        %s185 = scalar_lea.vmem [#allocation2], %s184
        %p186 = pneg %p43
        %p187 = pneg %p40
        %s188 = sand.u32 %s56, 1
        %s189 = scalar_lea.sflag [#allocation6], %s188
        %s190 = sand.u32 %s56, 1
        %s191 = smul.addr %s190, 16
        %s192 = scalar_lea.vmem [#allocation5], %s191
        %p193 = pneg %p69
        %p194 = pneg %p66
        %p195 = pneg %p95
        %p196 = pneg %p92
        %s197 = sand.u32 %s82, 1
        %s198 = scalar_lea.sflag [#allocation4], %s197
        %s199 = sand.u32 %s82, 1
        %s200 = smul.addr %s199, 8
        %s201 = scalar_lea.vmem [#allocation7], %s200
        %v202 = vld [vmem:[%s165] sm:$0xff]
        %v203 = vld [vmem:[%s165 + $0x8] sm:$0xff]
        %v204 = vld [vmem:[%s175] sm:$0xff]
        %v205 = vld [vmem:[%s175 + $0x8] sm:$0xff]
        %vm206 = vcmp.ne.f32.partialorder %v204, %v204
        %vm207 = vcmp.ne.f32.partialorder %v205, %v205
        %vm208 = vcmp.ne.f32.partialorder %v202, %v202
        %vm209 = vcmp.ne.f32.partialorder %v203, %v203
        %vm210 = vmor %vm206, %vm208
        %vm211 = vmor %vm207, %vm209
        %vm212 = vcmp.ge.f32.partialorder %v204, -42.98
        %vm213 = vcmp.ge.f32.partialorder %v205, -42.98
        %v214 = vsel %vm212, 1, 0
        %v215 = vsel %vm213, 1, 0
        %v216 = vcvt.s32.f32 %v214
        %v217 = vcvt.s32.f32 %v215
        %v218 = vsel %vm210, 0.0, %v216
        %v219 = vsel %vm211, 0.0, %v217
        %vm220 = vcmp.ge.f32.partialorder %v202, -42.98
        %vm221 = vcmp.ge.f32.partialorder %v203, -42.98
        %v222 = vsel %vm220, 1, 0
        %v223 = vsel %vm221, 1, 0
        %v224 = vcvt.s32.f32 %v222
        %v225 = vcvt.s32.f32 %v223
        %v226 = vsel %vm210, 0.0, %v224
        %v227 = vsel %vm211, 0.0, %v225
        %v228 = vmul.f32 %v218, %v226
        %v229 = vmul.f32 %v219, %v227
        %v230 = vadd.f32 %v228, %v229
        %231 = vadd.xlane.f32.xlu0 %v230
        %v232 = vpop.xlane.xlu0 %231
        %v233 = vadd.f32 %v218, %v219
        %234 = vadd.xlane.f32.xlu0 %v233
        %v235 = vpop.xlane.xlu0 %234
        %v236 = vadd.f32 %v226, %v227
        %237 = vadd.xlane.f32.xlu0 %v236
        %v238 = vpop.xlane.xlu0 %237
        %v239 = vsub.f32 %v235, %v232
        %v240 = vsub.f32 %v238, %v232
        %241 = vadd.xlane.f32.xlu0 2.0
        %v242 = vpop.xlane.xlu0 %241
        %v243 = vsub.f32 %v242, %v242
        %v244 = vlaneseq
        %v245 = vand.u32 %v244, 127
        %vm246 = vcmp.eq.s32.totalorder %v245, 0
        %v247 = vsel %vm246, %v232, 0.0
        %vm248 = vcmp.eq.s32.totalorder %v245, 1
        %v249 = vsel %vm248, %v239, %v247
        %vm250 = vcmp.eq.s32.totalorder %v245, 2
        %v251 = vsel %vm250, %v240, %v249
        %vm252 = vcmp.eq.s32.totalorder %v245, 3
        %v253 = vsel %vm252, %v242, %v251
        %vm254 = vcmp.eq.s32.totalorder %v245, 4
        %v255 = vsel %vm254, %v243, %v253
        %vm256 = vcmp.eq.s32.totalorder %v245, 5
        %v257 = vsel %vm256, %v243, %v255
        %vm258 = vcmp.eq.s32.totalorder %v245, 6
        %v259 = vsel %vm258, %v242, %v257
        %vm260 = vcmp.eq.s32.totalorder %v245, 7
        %v261 = vsel %vm260, %v243, %v259
        %vm262 = vcmp.eq.s32.totalorder %v245, 8
        %v263 = vsel %vm262, %v243, %v261
        %264 = vst [vmem:[%s201] sm:$0xff] %v263
        %s265 = sand.u32 %s82, 1
        %s266 = scalar_lea.sflag [#allocation4], %s265
        %s267 = sand.u32 %s82, 1
        %s268 = smul.addr %s267, 8
        %s269 = scalar_lea.vmem [#allocation7], %s268
        // Predicated region
        $region37: #{tpu_custom_call.1} parent=27 // pred_check
          %p270 = pneg %p92
        $region38: #{tpu_custom_call.1} parent=27 // pred_check_branch
          %272 = sbr.rel (%p270) target = $region40
        $region39: #{tpu_custom_call.1} parent=27 // pred_region
          %274 = vsyncadd %s266, 0
          %s275 = smul.addr %s22, 8
          %s276 = scalar_lea.hbm %s2, %s275
          %s278 = sshll.u32 %s269, 4
          %s279 = int_to_ptr.vmem [resolvable:$true] %s278
          %s280 = sshll.u32 %s276, 4
          %s281 = int_to_ptr.hbm [resolvable:$true] %s280
          %283 = dma.vmem_to_hbm [thread:$0]  %s279, 128, %s281, %s266
        $region40: #{tpu_custom_call.1} parent=27 // pred_fallthru
          _
      $region28: #{tpu_custom_call.1} parent=5 // pred_fallthru
        _
      %p284 = scmp.le.s32.totalorder 2, %s17
      // Predicated region
      $region41: #{tpu_custom_call.1} parent=5 // pred_check
        %p285 = pneg %p284
      $region42: #{tpu_custom_call.1} parent=5 // pred_check_branch
        %287 = sbr.rel (%p285) target = $region44
      $region43: #{tpu_custom_call.1} parent=5 // pred_region
        %s288 = ssub.s32 %s17, 2
        // Predicated region
        $region45: #{tpu_custom_call.1} parent=43 // pred_check
          %p289 = pneg %p98
        $region46: #{tpu_custom_call.1} parent=43 // pred_check_branch
          %291 = sbr.rel (%p289) target = $region48
        $region47: #{tpu_custom_call.1} parent=43 // pred_region
          %s292 = sand.u32 %s83, 1
          %s293 = scalar_lea.sflag [#allocation4], %s292
          %s294 = sand.u32 %s83, 1
          %s295 = smul.addr %s294, 8
          %s296 = scalar_lea.vmem [#allocation7], %s295
          %298 = dma.done %s293, 128
        $region48: #{tpu_custom_call.1} parent=43 // pred_fallthru
          _
      $region44: #{tpu_custom_call.1} parent=5 // pred_fallthru
        _
    $region6: #{tpu_custom_call.1} parent=1 // loop_footer
      %s21 = sadd.s32 1, %s17
    $region7: #{tpu_custom_call.1} parent=1 // loop_footer_branch
      %16 = sbr.rel target = $region3
    $region8: #{tpu_custom_call.1} parent=1 // loop_exit
      _
    %299 = vsyncpa [#allocation3], 1
    %s300 = scalar_lea.sflag [#allocation3], 1
    %301 = vsyncpa %s300, 1
    %302 = vsyncpa [#allocation6], 1
    %s303 = scalar_lea.sflag [#allocation6], 1
    %304 = vsyncpa %s303, 1
    %305 = vsyncpa [#allocation4], 1
    %s306 = scalar_lea.sflag [#allocation4], 1
    %307 = vsyncpa %s306, 1

</llo_original>
